<compile_context>
chip_gen: v7x
topology: tpu7x:2x2x1
jax: 0.10.0
libtpu: 0.0.40
codegen_flags: <defaults>
</compile_context>

<pallas_src>
import functools

import jax
import jax.numpy as jnp
from jax.experimental import pallas as pl
from jax.experimental.pallas import tpu as pltpu


def gin_skip_kernel(x_ref, a_ref, w_in_ref, b_in_ref, w2_ref, b2_ref,
                    w_tr_ref, b_tr_ref, out_ref, *, cout):
    bb, tn, _ = a_ref.shape
    cin = x_ref.shape[-1]
    cp = out_ref.shape[-1]          # lane-dense (padded) output width

    x = x_ref[...]                  # (bb, N, Cin)  bf16
    a = a_ref[...]                  # (bb, tn, N)   bf16, self-loops already folded in

    # DenseGINConv aggregation (eps = 0): h = (A + I) @ x, f32 accumulation.
    h = jnp.einsum("brn,bnc->brc", a, x,
                   preferred_element_type=jnp.float32)          # (bb, tn, Cin) f32
    h2 = h.reshape(bb * tn, cin).astype(jnp.bfloat16)

    # Fused shared-LHS matmul: columns [0:cp] = proj Linear, [cp:cp+H] = MLP layer 1.
    z = jnp.dot(h2, w_in_ref[...],
                preferred_element_type=jnp.float32) + b_in_ref[...]
    xskip2 = z[:, :cp]                                          # (bb*tn, cp)
    h1 = jnp.maximum(z[:, cp:], 0.0).astype(jnp.bfloat16)       # ReLU, (bb*tn, H)

    # MLP layer 2.
    out_gcn2 = jnp.dot(h1, w2_ref[...],
                       preferred_element_type=jnp.float32) + b2_ref[...]

    # Transmission layers for both branches, fused into one matmul.
    # TODO(synk): LinearTransmissionLayer source not provided; implemented as
    # sum-over-nodes readout followed by a Linear (its canonical ggg definition).
    x_sum = jnp.sum(x.astype(jnp.float32), axis=1).astype(jnp.bfloat16)   # (bb, Cin)
    tr = jnp.dot(x_sum, w_tr_ref[...],
                 preferred_element_type=jnp.float32) + b_tr_ref[...]       # (bb, 2*cp)
    tr_gcn = tr[:, :cp]
    tr_proj = tr[:, cp:]

    xg = out_gcn2.reshape(bb, tn, cp) + tr_gcn[:, None, :]
    xskip = xskip2.reshape(bb, tn, cp) + tr_proj[:, None, :]

    # NodeFeatNorm(mode='layer', affine=False): per-node LayerNorm over the
    # `cout` valid channels.  Padded channels are exactly zero (zero-padded
    # weights/biases) and are masked out of the statistics.
    col = jax.lax.broadcasted_iota(jnp.int32, (bb, tn, cp), 2)
    valid = col < cout
    mu = jnp.sum(jnp.where(valid, xg, 0.0), axis=-1, keepdims=True) / cout
    d = jnp.where(valid, xg - mu, 0.0)
    var = jnp.sum(d * d, axis=-1, keepdims=True) / cout
    xg_n = (xg - mu) * jax.lax.rsqrt(var + 1e-5)

    out_ref[...] = (xg_n + xskip).astype(out_ref.dtype)


def _pick_block_b(b, max_block=8):
    """Largest divisor of b (<= max_block) that keeps >= 2 grid steps (v7x dual TC)."""
    for cand in range(min(b, max_block), 0, -1):
        if b % cand == 0 and (b // cand >= 2 or b == 1):
            return cand
    return 1


def gin_skip_pallas(x, A, params, *, block_b=None, max_row_tile=512):
    B, N, Cin = x.shape
    H = params["w1"].shape[1]
    Cout = params["w2"].shape[1]
    LANE = 128
    Cp = -(-Cout // LANE) * LANE          # output channels padded to a lane multiple

    if block_b is None:
        block_b = _pick_block_b(B)
    assert B % block_b == 0

    # Node-row tile for the adjacency / output blocks (keeps the [tn, N] A tile
    # small enough for VMEM on large graphs; at demo sizes tn == N).
    tn = N
    if N > max_row_tile and N % max_row_tile == 0:
        tn = max_row_tile

    # Fold the GIN self-loop into the adjacency: h = (A + I) @ x.
    A_hat = A + jnp.eye(N, dtype=A.dtype)[None]

    def pad_cols(w):
        return jnp.pad(w, [(0, 0)] * (w.ndim - 1) + [(0, Cp - w.shape[-1])])

    # Pad output-channel weights to the lane-dense width, fuse shared-LHS mats.
    w2, b2 = pad_cols(params["w2"]), pad_cols(params["b2"])
    wp, bp = pad_cols(params["wp"]), pad_cols(params["bp"])
    wt, bt = pad_cols(params["wt"]), pad_cols(params["bt"])
    wtp, btp = pad_cols(params["wtp"]), pad_cols(params["btp"])

    w_in = jnp.concatenate([wp, params["w1"]], axis=1)    # (Cin, Cp + H)
    b_in = jnp.concatenate([bp, params["b1"]], axis=1)    # (1,  Cp + H)
    w_tr = jnp.concatenate([wt, wtp], axis=1)             # (Cin, 2*Cp)
    b_tr = jnp.concatenate([bt, btp], axis=1)             # (1,  2*Cp)

    # bf16 operands for the MXU (A is 0/1 so exact); accumulation stays f32.
    x_b = x.astype(jnp.bfloat16)
    a_b = A_hat.astype(jnp.bfloat16)
    w_in_b = w_in.astype(jnp.bfloat16)
    w2_b = w2.astype(jnp.bfloat16)
    w_tr_b = w_tr.astype(jnp.bfloat16)
    b_in_f = b_in.astype(jnp.float32)
    b2_f = b2.astype(jnp.float32)
    b_tr_f = b_tr.astype(jnp.float32)

    nb, nr = B // block_b, N // tn
    grid = (nb, nr)

    x_map = lambda i, r: (i, 0, 0)    # x stays resident across the row axis
    a_map = lambda i, r: (i, r, 0)
    rep = lambda i, r: (0, 0)

    in_specs = [
        pl.BlockSpec((block_b, N, Cin), x_map),     # x
        pl.BlockSpec((block_b, tn, N), a_map),      # A + I (row tile)
        pl.BlockSpec((Cin, Cp + H), rep),           # [wp | w1]
        pl.BlockSpec((1, Cp + H), rep),             # [bp | b1]
        pl.BlockSpec((H, Cp), rep),                 # w2
        pl.BlockSpec((1, Cp), rep),                 # b2
        pl.BlockSpec((Cin, 2 * Cp), rep),           # [wt | wtp]
        pl.BlockSpec((1, 2 * Cp), rep),             # [bt | btp]
    ]
    out_spec = pl.BlockSpec((block_b, tn, Cp), a_map)

    # Size the scoped VMEM limit from the (double-buffered) block footprint.
    blk_bytes = 2 * (block_b * N * Cin * 2 + block_b * tn * N * 2
                     + block_b * tn * Cp * 4)
    w_bytes = ((Cin * (Cp + H) + H * Cp + Cin * 2 * Cp) * 2
               + (4 * Cp + H) * 4)
    vmem_limit = int(min(64 * 1024 * 1024,
                         max(32 * 1024 * 1024, 2 * (blk_bytes + w_bytes))))

    flops = int(2 * B * (N * N * Cin + N * Cin * (Cp + H) + N * H * Cp
                         + Cin * 2 * Cp) + 10 * B * N * Cp)
    bytes_accessed = int(B * N * Cin * 2 + B * N * N * 2
                         + (Cin * (Cp + H) + H * Cp + 2 * Cin * Cp) * 2
                         + (4 * Cp + H) * 4
                         + B * N * Cp * 4)
    cost = pl.CostEstimate(flops=flops, transcendentals=int(B * N),
                           bytes_accessed=bytes_accessed)

    out_padded = pl.pallas_call(
        functools.partial(gin_skip_kernel, cout=Cout),
        out_shape=jax.ShapeDtypeStruct((B, N, Cp), jnp.float32),
        grid_spec=pltpu.PrefetchScalarGridSpec(
            num_scalar_prefetch=0,
            grid=grid,
            in_specs=in_specs,
            out_specs=out_spec,
        ),
        compiler_params=pltpu.CompilerParams(
            dimension_semantics=("parallel", "parallel"),
            vmem_limit_bytes=vmem_limit,
        ),
        cost_estimate=cost,
    )(x_b, a_b, w_in_b, b_in_f, w2_b, b2_f, w_tr_b, b_tr_f)

    # Drop the lane padding.
    return out_padded[:, :, :Cout].astype(x.dtype)


def gin_skip_reference(x, A, p):
    """Pure-JAX reference of the same forward under the same bf16/f32 policy."""
    f32, bf16 = jnp.float32, jnp.bfloat16
    N = A.shape[-1]
    a = (A + jnp.eye(N, dtype=A.dtype)[None]).astype(bf16)
    xb = x.astype(bf16)
    h = jnp.einsum("bij,bjc->bic", a, xb, preferred_element_type=f32)
    hb = h.astype(bf16)
    h1 = jnp.maximum(jnp.einsum("bnc,ch->bnh", hb, p["w1"].astype(bf16),
                                preferred_element_type=f32) + p["b1"], 0.0)
    out_gcn = jnp.einsum("bnh,hc->bnc", h1.astype(bf16), p["w2"].astype(bf16),
                         preferred_element_type=f32) + p["b2"]
    x_sum = jnp.sum(xb.astype(f32), axis=1).astype(bf16)            # (B, Cin)
    tr_g = jnp.einsum("bc,cd->bd", x_sum, p["wt"].astype(bf16),
                      preferred_element_type=f32) + p["bt"]
    tr_p = jnp.einsum("bc,cd->bd", x_sum, p["wtp"].astype(bf16),
                      preferred_element_type=f32) + p["btp"]
    xg = out_gcn + tr_g[:, None, :]
    xskip = jnp.einsum("bnc,cd->bnd", hb, p["wp"].astype(bf16),
                       preferred_element_type=f32) + p["bp"] + tr_p[:, None, :]
    mu = jnp.mean(xg, axis=-1, keepdims=True)
    var = jnp.mean((xg - mu) ** 2, axis=-1, keepdims=True)
    xg_n = (xg - mu) * jax.lax.rsqrt(var + 1e-5)
    return xg_n + xskip


def init_params(key, cin, hidden, cout):
    ks = jax.random.split(key, 10)
    scale = 0.1
    return {
        # weights stored already transposed to [in, out] (PyTorch Linear is [out, in])
        "w1": scale * jax.random.normal(ks[0], (cin, hidden), jnp.float32),
        "b1": scale * jax.random.normal(ks[1], (1, hidden), jnp.float32),
        "w2": scale * jax.random.normal(ks[2], (hidden, cout), jnp.float32),
        "b2": scale * jax.random.normal(ks[3], (1, cout), jnp.float32),
        "wt": scale * jax.random.normal(ks[4], (cin, cout), jnp.float32),
        "bt": scale * jax.random.normal(ks[5], (1, cout), jnp.float32),
        "wp": scale * jax.random.normal(ks[6], (cin, cout), jnp.float32),
        "bp": scale * jax.random.normal(ks[7], (1, cout), jnp.float32),
        "wtp": scale * jax.random.normal(ks[8], (cin, cout), jnp.float32),
        "btp": scale * jax.random.normal(ks[9], (1, cout), jnp.float32),
    }


if __name__ == "__main__":
    B, N, CIN, HIDDEN, COUT = 8, 16, 4, 32, 8

    key = jax.random.PRNGKey(0)
    kx, ka, kp = jax.random.split(key, 3)

    x = jax.random.normal(kx, (B, N, CIN), jnp.float32)
    # symmetric 0/1 adjacency without self-loops (the wrapper adds the GIN loop)
    a_rand = jax.random.uniform(ka, (B, N, N))
    A = (a_rand + jnp.swapaxes(a_rand, -1, -2) > 1.0).astype(jnp.float32)
    A = A * (1.0 - jnp.eye(N, dtype=jnp.float32)[None])

    params = init_params(kp, CIN, HIDDEN, COUT)

    out = gin_skip_pallas(x, A, params)
    out = jax.block_until_ready(out)

    ref = gin_skip_reference(x, A, params)
    assert out.shape == (B, N, COUT)
    assert jnp.allclose(out, ref, atol=2e-3, rtol=2e-3), "mismatch vs reference"

    print("KERNEL_OK")
</pallas_src>

<mosaic_0001>
module attributes {stable_mosaic.version = 11 : i64} {
  func.func @gin_skip_kernel(%arg0: i32, %arg1: i32, %arg2: memref<4x16x4xbf16, #tpu.memory_space<vmem>>, %arg3: memref<4x16x16xbf16, #tpu.memory_space<vmem>>, %arg4: memref<4x160xbf16, #tpu.memory_space<vmem>>, %arg5: memref<1x160xf32, #tpu.memory_space<vmem>>, %arg6: memref<32x128xbf16, #tpu.memory_space<vmem>>, %arg7: memref<1x128xf32, #tpu.memory_space<vmem>>, %arg8: memref<4x256xbf16, #tpu.memory_space<vmem>>, %arg9: memref<1x256xf32, #tpu.memory_space<vmem>>, %arg10: memref<4x16x128xf32, #tpu.memory_space<vmem>>) attributes {dimension_semantics = [#tpu.dimension_semantics<parallel>, #tpu.dimension_semantics<parallel>], iteration_bounds = array<i64: 2, 1>, scalar_prefetch = 0 : i64, scratch_operands = 0 : i64, tpu.core_type = #tpu.core_type<tc>, window_params = [{transform_indices = @transform_0, window_bounds = array<i64: 4, 16, 4>}, {transform_indices = @transform_1, window_bounds = array<i64: 4, 16, 16>}, {pipeline_mode = #tpu.pipeline_mode<synchronous>, transform_indices = @transform_2, window_bounds = array<i64: 4, 160>}, {pipeline_mode = #tpu.pipeline_mode<synchronous>, transform_indices = @transform_3, window_bounds = array<i64: 1, 160>}, {pipeline_mode = #tpu.pipeline_mode<synchronous>, transform_indices = @transform_4, window_bounds = array<i64: 32, 128>}, {pipeline_mode = #tpu.pipeline_mode<synchronous>, transform_indices = @transform_5, window_bounds = array<i64: 1, 128>}, {pipeline_mode = #tpu.pipeline_mode<synchronous>, transform_indices = @transform_6, window_bounds = array<i64: 4, 256>}, {pipeline_mode = #tpu.pipeline_mode<synchronous>, transform_indices = @transform_7, window_bounds = array<i64: 1, 256>}, {transform_indices = @transform_8, window_bounds = array<i64: 4, 16, 128>}]} {
    %c0 = arith.constant 0 : index
    %c0_0 = arith.constant 0 : index
    %c0_1 = arith.constant 0 : index
    %0 = vector.load %arg2[%c0, %c0_0, %c0_1] : memref<4x16x4xbf16, #tpu.memory_space<vmem>>, vector<4x16x4xbf16>
    %c0_2 = arith.constant 0 : index
    %c0_3 = arith.constant 0 : index
    %c0_4 = arith.constant 0 : index
    %1 = vector.load %arg3[%c0_2, %c0_3, %c0_4] : memref<4x16x16xbf16, #tpu.memory_space<vmem>>, vector<4x16x16xbf16>
    "tpu.trace_start"() <{level = 10 : i32, message = "brn,bnc->brc"}> : () -> ()
    %cst = arith.constant dense<0.000000e+00> : vector<4x16x4xf32>
    %2 = tpu.matmul %1, %0, %cst {dimension_numbers = #tpu.dot_dimension_numbers<[2], [1], [1], [2], [0, 0, 0, 1, 1, 2], [0], [0]>} : vector<4x16x16xbf16>, vector<4x16x4xbf16>, vector<4x16x4xf32> -> vector<4x16x4xf32>
    "tpu.trace_stop"() : () -> ()
    %3 = vector.shape_cast %2 : vector<4x16x4xf32> to vector<64x4xf32>
    %4 = arith.truncf %3 : vector<64x4xf32> to vector<64x4xbf16>
    %c0_5 = arith.constant 0 : index
    %c0_6 = arith.constant 0 : index
    %5 = vector.load %arg4[%c0_5, %c0_6] : memref<4x160xbf16, #tpu.memory_space<vmem>>, vector<4x160xbf16>
    %cst_7 = arith.constant dense<0.000000e+00> : vector<64x160xf32>
    %6 = tpu.matmul %4, %5, %cst_7 {dimension_numbers = #tpu.dot_dimension_numbers<[1], [0], [0], [1], [0, 0, 1, 1], [], []>} : vector<64x4xbf16>, vector<4x160xbf16>, vector<64x160xf32> -> vector<64x160xf32>
    %c0_8 = arith.constant 0 : index
    %c0_9 = arith.constant 0 : index
    %7 = vector.load %arg5[%c0_8, %c0_9] : memref<1x160xf32, #tpu.memory_space<vmem>>, vector<1x160xf32>
    %8 = vector.broadcast %7 : vector<1x160xf32> to vector<64x160xf32>
    %9 = arith.addf %6, %8 : vector<64x160xf32>
    %10 = vector.extract_strided_slice %9 {offsets = [0, 0], sizes = [64, 128], strides = [1, 1]} : vector<64x160xf32> to vector<64x128xf32>
    %11 = vector.extract_strided_slice %9 {offsets = [0, 128], sizes = [64, 32], strides = [1, 1]} : vector<64x160xf32> to vector<64x32xf32>
    %cst_10 = arith.constant 0.000000e+00 : f32
    %12 = vector.broadcast %cst_10 : f32 to vector<64x32xf32>
    %13 = arith.maximumf %11, %12 : vector<64x32xf32>
    %14 = arith.truncf %13 : vector<64x32xf32> to vector<64x32xbf16>
    %c0_11 = arith.constant 0 : index
    %c0_12 = arith.constant 0 : index
    %15 = vector.load %arg6[%c0_11, %c0_12] : memref<32x128xbf16, #tpu.memory_space<vmem>>, vector<32x128xbf16>
    %cst_13 = arith.constant dense<0.000000e+00> : vector<64x128xf32>
    %16 = tpu.matmul %14, %15, %cst_13 {dimension_numbers = #tpu.dot_dimension_numbers<[1], [0], [0], [1], [0, 0, 1, 1], [], []>} : vector<64x32xbf16>, vector<32x128xbf16>, vector<64x128xf32> -> vector<64x128xf32>
    %c0_14 = arith.constant 0 : index
    %c0_15 = arith.constant 0 : index
    %17 = vector.load %arg7[%c0_14, %c0_15] : memref<1x128xf32, #tpu.memory_space<vmem>>, vector<1x128xf32>
    %18 = vector.broadcast %17 : vector<1x128xf32> to vector<64x128xf32>
    %19 = arith.addf %16, %18 : vector<64x128xf32>
    %20 = arith.extf %0 : vector<4x16x4xbf16> to vector<4x16x4xf32>
    %cst_16 = arith.constant dense<0.000000e+00> : vector<4x4xf32>
    %21 = vector.multi_reduction <add>, %20, %cst_16 [1] : vector<4x16x4xf32> to vector<4x4xf32>
    %22 = arith.truncf %21 : vector<4x4xf32> to vector<4x4xbf16>
    %c0_17 = arith.constant 0 : index
    %c0_18 = arith.constant 0 : index
    %23 = vector.load %arg8[%c0_17, %c0_18] : memref<4x256xbf16, #tpu.memory_space<vmem>>, vector<4x256xbf16>
    %cst_19 = arith.constant dense<0.000000e+00> : vector<4x256xf32>
    %24 = tpu.matmul %22, %23, %cst_19 {dimension_numbers = #tpu.dot_dimension_numbers<[1], [0], [0], [1], [0, 0, 1, 1], [], []>} : vector<4x4xbf16>, vector<4x256xbf16>, vector<4x256xf32> -> vector<4x256xf32>
    %c0_20 = arith.constant 0 : index
    %c0_21 = arith.constant 0 : index
    %25 = vector.load %arg9[%c0_20, %c0_21] : memref<1x256xf32, #tpu.memory_space<vmem>>, vector<1x256xf32>
    %26 = vector.broadcast %25 : vector<1x256xf32> to vector<4x256xf32>
    %27 = arith.addf %24, %26 : vector<4x256xf32>
    %28 = vector.extract_strided_slice %27 {offsets = [0, 0], sizes = [4, 128], strides = [1, 1]} : vector<4x256xf32> to vector<4x128xf32>
    %29 = vector.extract_strided_slice %27 {offsets = [0, 128], sizes = [4, 128], strides = [1, 1]} : vector<4x256xf32> to vector<4x128xf32>
    %30 = vector.shape_cast %19 : vector<64x128xf32> to vector<4x16x128xf32>
    %31 = vector.shape_cast %28 : vector<4x128xf32> to vector<4x1x128xf32>
    %32 = vector.broadcast %31 : vector<4x1x128xf32> to vector<4x16x128xf32>
    %33 = arith.addf %30, %32 : vector<4x16x128xf32>
    %34 = vector.shape_cast %10 : vector<64x128xf32> to vector<4x16x128xf32>
    %35 = vector.shape_cast %29 : vector<4x128xf32> to vector<4x1x128xf32>
    %36 = vector.broadcast %35 : vector<4x1x128xf32> to vector<4x16x128xf32>
    %37 = arith.addf %34, %36 : vector<4x16x128xf32>
    %38 = tpu.iota {dimensions = array<i32: 2>} : vector<4x16x128xi32>
    %c8_i32 = arith.constant 8 : i32
    %39 = vector.broadcast %c8_i32 : i32 to vector<4x16x128xi32>
    %40 = arith.cmpi slt, %38, %39 : vector<4x16x128xi32>
    %cst_22 = arith.constant 0.000000e+00 : f32
    %41 = vector.broadcast %cst_22 : f32 to vector<4x16x128xf32>
    %42 = arith.select %40, %33, %41 : vector<4x16x128xi1>, vector<4x16x128xf32>
    %cst_23 = arith.constant dense<0.000000e+00> : vector<4x16xf32>
    %43 = vector.multi_reduction <add>, %42, %cst_23 [2] : vector<4x16x128xf32> to vector<4x16xf32>
    %44 = vector.shape_cast %43 : vector<4x16xf32> to vector<4x16x1xf32>
    %cst_24 = arith.constant 8.000000e+00 : f32
    %45 = vector.broadcast %cst_24 : f32 to vector<4x16x1xf32>
    %46 = arith.divf %44, %45 : vector<4x16x1xf32>
    %47 = vector.broadcast %46 : vector<4x16x1xf32> to vector<4x16x128xf32>
    %48 = arith.subf %33, %47 : vector<4x16x128xf32>
    %cst_25 = arith.constant 0.000000e+00 : f32
    %49 = vector.broadcast %cst_25 : f32 to vector<4x16x128xf32>
    %50 = arith.select %40, %48, %49 : vector<4x16x128xi1>, vector<4x16x128xf32>
    %51 = arith.mulf %50, %50 : vector<4x16x128xf32>
    %cst_26 = arith.constant dense<0.000000e+00> : vector<4x16xf32>
    %52 = vector.multi_reduction <add>, %51, %cst_26 [2] : vector<4x16x128xf32> to vector<4x16xf32>
    %53 = vector.shape_cast %52 : vector<4x16xf32> to vector<4x16x1xf32>
    %cst_27 = arith.constant 8.000000e+00 : f32
    %54 = vector.broadcast %cst_27 : f32 to vector<4x16x1xf32>
    %55 = arith.divf %53, %54 : vector<4x16x1xf32>
    %56 = vector.broadcast %46 : vector<4x16x1xf32> to vector<4x16x128xf32>
    %57 = arith.subf %33, %56 : vector<4x16x128xf32>
    %cst_28 = arith.constant 9.99999974E-6 : f32
    %58 = vector.broadcast %cst_28 : f32 to vector<4x16x1xf32>
    %59 = arith.addf %55, %58 : vector<4x16x1xf32>
    %60 = math.rsqrt %59 : vector<4x16x1xf32>
    %61 = vector.broadcast %60 : vector<4x16x1xf32> to vector<4x16x128xf32>
    %62 = arith.mulf %57, %61 : vector<4x16x128xf32>
    %63 = arith.addf %62, %37 : vector<4x16x128xf32>
    %c0_29 = arith.constant 0 : index
    %c0_30 = arith.constant 0 : index
    %c0_31 = arith.constant 0 : index
    %64 = vector.load %arg10[%c0_29, %c0_30, %c0_31] : memref<4x16x128xf32, #tpu.memory_space<vmem>>, vector<4x16x128xf32>
    tpu.vector_store %arg10[%c0_29, %c0_30, %c0_31], %63 {strides = array<i32>} : memref<4x16x128xf32, #tpu.memory_space<vmem>>, vector<4x16x128xf32>,
    return
  }
  func.func @transform_0(%arg0: i32, %arg1: i32) -> (i32, i32, i32) {
    %c0_i32 = arith.constant 0 : i32
    %c0_i32_0 = arith.constant 0 : i32
    %c0_i32_1 = arith.constant 0 : i32
    return %arg0, %c0_i32, %c0_i32_0 : i32, i32, i32
  }
  func.func @transform_1(%arg0: i32, %arg1: i32) -> (i32, i32, i32) {
    %c0_i32 = arith.constant 0 : i32
    %c0_i32_0 = arith.constant 0 : i32
    return %arg0, %arg1, %c0_i32 : i32, i32, i32
  }
  func.func @transform_2(%arg0: i32, %arg1: i32) -> (i32, i32) {
    %c0_i32 = arith.constant 0 : i32
    %c0_i32_0 = arith.constant 0 : i32
    %c0_i32_1 = arith.constant 0 : i32
    return %c0_i32, %c0_i32_0 : i32, i32
  }
  func.func @transform_3(%arg0: i32, %arg1: i32) -> (i32, i32) {
    %c0_i32 = arith.constant 0 : i32
    %c0_i32_0 = arith.constant 0 : i32
    %c0_i32_1 = arith.constant 0 : i32
    return %c0_i32, %c0_i32_0 : i32, i32
  }
  func.func @transform_4(%arg0: i32, %arg1: i32) -> (i32, i32) {
    %c0_i32 = arith.constant 0 : i32
    %c0_i32_0 = arith.constant 0 : i32
    %c0_i32_1 = arith.constant 0 : i32
    return %c0_i32, %c0_i32_0 : i32, i32
  }
  func.func @transform_5(%arg0: i32, %arg1: i32) -> (i32, i32) {
    %c0_i32 = arith.constant 0 : i32
    %c0_i32_0 = arith.constant 0 : i32
    %c0_i32_1 = arith.constant 0 : i32
    return %c0_i32, %c0_i32_0 : i32, i32
  }
  func.func @transform_6(%arg0: i32, %arg1: i32) -> (i32, i32) {
    %c0_i32 = arith.constant 0 : i32
    %c0_i32_0 = arith.constant 0 : i32
    %c0_i32_1 = arith.constant 0 : i32
    return %c0_i32, %c0_i32_0 : i32, i32
  }
  func.func @transform_7(%arg0: i32, %arg1: i32) -> (i32, i32) {
    %c0_i32 = arith.constant 0 : i32
    %c0_i32_0 = arith.constant 0 : i32
    %c0_i32_1 = arith.constant 0 : i32
    return %c0_i32, %c0_i32_0 : i32, i32
  }
  func.func @transform_8(%arg0: i32, %arg1: i32) -> (i32, i32, i32) {
    %c0_i32 = arith.constant 0 : i32
    %c0_i32_0 = arith.constant 0 : i32
    return %arg0, %arg1, %c0_i32 : i32, i32, i32
  }
}

</mosaic_0001>

<llo_original>
// kernel: tpu_custom_call.1
$region0: #{tpu_custom_call.1}
  #allocation0 [shape = 'u32[]', space=smem, size = 0x4, offset = 0x4, fixed_abs, tag = 'smem constant byte address 0x4 - core index']
  #allocation1 [shape = 'u32[144,128]{1,0:T(1,128)}', space=vmem, size = 0x12000, scoped, tag = 'internal scratch']
  %s0 = inlined_call_operand.vmem [shape: bf16[8,16,4], index: 0, kind: input, shape index: {}]
  %s1 = inlined_call_operand.vmem [shape: bf16[8,16,16], index: 1, kind: input, shape index: {}]
  %s2 = inlined_call_operand.vmem [shape: bf16[4,160], index: 2, kind: input, shape index: {}]
  %s3 = inlined_call_operand.vmem [shape: f32[1,160], index: 3, kind: input, shape index: {}]
  %s4 = inlined_call_operand.vmem [shape: bf16[32,128], index: 4, kind: input, shape index: {}]
  %s5 = inlined_call_operand.vmem [shape: f32[1,128], index: 5, kind: input, shape index: {}]
  %s6 = inlined_call_operand.vmem [shape: bf16[4,256], index: 6, kind: input, shape index: {}]
  %s7 = inlined_call_operand.vmem [shape: f32[1,256], index: 7, kind: input, shape index: {}]
  %s8 = inlined_call_operand.hbm [shape: f32[8,16,128], index: 8, kind: output, shape index: {}]
  %s9 = sld [smem:[#allocation0]]
  $region65: #{tpu_custom_call.1} parent=0
    _
  %s11 = ssub.s32 1, %s9
  %s12 = scalar_select 0, %s11, %s9
  $region1: #{tpu_custom_call.1} parent=0
    #allocation2 [shape = 'u8[65536]{0}', space=vmem, size = 0x10000, scoped, tag = 'output window, operand 0']
    #allocation3 [shape = 's32[2]{0}', space=sflag, size = 0x8, scoped, tag = 'scoped memory for tpu_custom_call.1']
    %13 = vsyncpa [#allocation3], 0
    %s14 = scalar_lea.sflag [#allocation3], 1
    %15 = vsyncpa %s14, 0
    loop: start=0, step=1, limit=4
    $region2: #{tpu_custom_call.1} parent=1 // loop_pre_header
      _
    $region3: #{tpu_custom_call.1} parent=1 // loop_header
      %s17 = sphi 0, %s21
      %p18 = scmp.ge.s32.totalorder %s17, 4
      %s24 = sphi 0, %s36
      %s25 = sphi 0, %s32
      %s26 = sphi 0, %s24
      %s27 = sphi 0, %s25
      %s28 = sphi 0, %s26
      %s29 = sphi 0, %s27
      %s39 = sphi 0, %s41
      %s42 = sphi 0, %s39
      %s43 = sphi 0, %s42
      %s59 = sphi 0, %s43
      %s67 = sphi 0, %s69
      %s70 = sphi 0, %s67
      %s71 = sphi 0, %s70
      %s87 = sphi 0, %s71
      %s91 = sphi 0, %s91
      %s93 = sphi 0, %s91
      %s94 = sphi 0, %s93
      %s108 = sphi 0, %s94
      %s112 = sphi 0, %s112
      %s114 = sphi 0, %s112
      %s115 = sphi 0, %s114
      %s129 = sphi 0, %s115
      %s133 = sphi 0, %s133
      %s135 = sphi 0, %s133
      %s136 = sphi 0, %s135
      %s150 = sphi 0, %s136
      %s154 = sphi 0, %s154
      %s156 = sphi 0, %s154
      %s157 = sphi 0, %s156
      %s171 = sphi 0, %s157
      %s175 = sphi 0, %s175
      %s177 = sphi 0, %s175
      %s178 = sphi 0, %s177
      %s192 = sphi 0, %s178
      %s196 = sphi 0, %s196
      %s198 = sphi 0, %s196
      %s199 = sphi 0, %s198
      %s213 = sphi 0, %s199
      %s221 = sphi 0, %s223
      %s224 = sphi 0, %s221
      %s225 = sphi 0, %s224
      %s241 = sphi 0, %s225
    $region4: #{tpu_custom_call.1} parent=1 // loop_header_branch
      %20 = sbr.rel (%p18) target = $region8
    $region5: #{tpu_custom_call.1} parent=1 // loop_body
      %s22 = ssub.s32 %s17, 1
      %s23 = ssub.s32 %s17, 2
      %s30 = sadd.s32 1, %s25
      %p31 = scmp.ge.s32.totalorder %s30, 1
      %s32 = scalar_select %p31, 0, %s30
      %s33 = sadd.s32 1, %s24
      %s34 = scalar_select %p31, %s33, %s24
      %p35 = scmp.ge.s32.totalorder %s34, 2
      %s36 = scalar_select %p35, 0, %s34
      %s37 = ssub.s32 %s24, %s36
      %p38 = scmp.eq.s32.totalorder %s37, 0
      %s40 = sadd.s32 %s39, 1
      %s41 = scalar_select %p38, %s39, %s40
      %p44 = pneg %p38
      %p45 = scmp.eq.s32.totalorder %s17, 1
      %p46 = por %p44, %p45
      %p47 = scmp.ne.s32.totalorder %s39, %s42
      %p48 = scmp.eq.s32.totalorder %s17, 0
      %p49 = por %p47, %p48
      %p50 = scmp.ne.s32.totalorder %s39, %s42
      %p51 = scmp.eq.s32.totalorder %s22, 1
      %p52 = por %p50, %p51
      %p53 = scmp.ne.s32.totalorder %s42, %s43
      %p54 = scmp.eq.s32.totalorder %s22, 0
      %p55 = por %p53, %p54
      %p56 = scmp.ne.s32.totalorder %s42, %s43
      %p57 = scmp.eq.s32.totalorder %s23, 1
      %p58 = por %p56, %p57
      %p60 = scmp.ne.s32.totalorder %s43, %s59
      %p61 = scmp.eq.s32.totalorder %s23, 0
      %p62 = por %p60, %p61
      %s63 = ssub.s32 %s24, %s36
      %s64 = ssub.s32 %s25, %s32
      %s65 = sor.u32 %s63, %s64
      %p66 = scmp.eq.s32.totalorder %s65, 0
      %s68 = sadd.s32 %s67, 1
      %s69 = scalar_select %p66, %s67, %s68
      %p72 = pneg %p66
      %p73 = scmp.eq.s32.totalorder %s17, 1
      %p74 = por %p72, %p73
      %p75 = scmp.ne.s32.totalorder %s67, %s70
      %p76 = scmp.eq.s32.totalorder %s17, 0
      %p77 = por %p75, %p76
      %p78 = scmp.ne.s32.totalorder %s67, %s70
      %p79 = scmp.eq.s32.totalorder %s22, 1
      %p80 = por %p78, %p79
      %p81 = scmp.ne.s32.totalorder %s70, %s71
      %p82 = scmp.eq.s32.totalorder %s22, 0
      %p83 = por %p81, %p82
      %p84 = scmp.ne.s32.totalorder %s70, %s71
      %p85 = scmp.eq.s32.totalorder %s23, 1
      %p86 = por %p84, %p85
      %p88 = scmp.ne.s32.totalorder %s71, %s87
      %p89 = scmp.eq.s32.totalorder %s23, 0
      %p90 = por %p88, %p89
      %s92 = sadd.s32 %s91, 1
      %p95 = scmp.eq.s32.totalorder %s17, 1
      %p96 = scmp.ne.s32.totalorder %s91, %s93
      %p97 = scmp.eq.s32.totalorder %s17, 0
      %p98 = por %p96, %p97
      %p99 = scmp.ne.s32.totalorder %s91, %s93
      %p100 = scmp.eq.s32.totalorder %s22, 1
      %p101 = por %p99, %p100
      %p102 = scmp.ne.s32.totalorder %s93, %s94
      %p103 = scmp.eq.s32.totalorder %s22, 0
      %p104 = por %p102, %p103
      %p105 = scmp.ne.s32.totalorder %s93, %s94
      %p106 = scmp.eq.s32.totalorder %s23, 1
      %p107 = por %p105, %p106
      %p109 = scmp.ne.s32.totalorder %s94, %s108
      %p110 = scmp.eq.s32.totalorder %s23, 0
      %p111 = por %p109, %p110
      %s113 = sadd.s32 %s112, 1
      %p116 = scmp.eq.s32.totalorder %s17, 1
      %p117 = scmp.ne.s32.totalorder %s112, %s114
      %p118 = scmp.eq.s32.totalorder %s17, 0
      %p119 = por %p117, %p118
      %p120 = scmp.ne.s32.totalorder %s112, %s114
      %p121 = scmp.eq.s32.totalorder %s22, 1
      %p122 = por %p120, %p121
      %p123 = scmp.ne.s32.totalorder %s114, %s115
      %p124 = scmp.eq.s32.totalorder %s22, 0
      %p125 = por %p123, %p124
      %p126 = scmp.ne.s32.totalorder %s114, %s115
      %p127 = scmp.eq.s32.totalorder %s23, 1
      %p128 = por %p126, %p127
      %p130 = scmp.ne.s32.totalorder %s115, %s129
      %p131 = scmp.eq.s32.totalorder %s23, 0
      %p132 = por %p130, %p131
      %s134 = sadd.s32 %s133, 1
      %p137 = scmp.eq.s32.totalorder %s17, 1
      %p138 = scmp.ne.s32.totalorder %s133, %s135
      %p139 = scmp.eq.s32.totalorder %s17, 0
      %p140 = por %p138, %p139
      %p141 = scmp.ne.s32.totalorder %s133, %s135
      %p142 = scmp.eq.s32.totalorder %s22, 1
      %p143 = por %p141, %p142
      %p144 = scmp.ne.s32.totalorder %s135, %s136
      %p145 = scmp.eq.s32.totalorder %s22, 0
      %p146 = por %p144, %p145
      %p147 = scmp.ne.s32.totalorder %s135, %s136
      %p148 = scmp.eq.s32.totalorder %s23, 1
      %p149 = por %p147, %p148
      %p151 = scmp.ne.s32.totalorder %s136, %s150
      %p152 = scmp.eq.s32.totalorder %s23, 0
      %p153 = por %p151, %p152
      %s155 = sadd.s32 %s154, 1
      %p158 = scmp.eq.s32.totalorder %s17, 1
      %p159 = scmp.ne.s32.totalorder %s154, %s156
      %p160 = scmp.eq.s32.totalorder %s17, 0
      %p161 = por %p159, %p160
      %p162 = scmp.ne.s32.totalorder %s154, %s156
      %p163 = scmp.eq.s32.totalorder %s22, 1
      %p164 = por %p162, %p163
      %p165 = scmp.ne.s32.totalorder %s156, %s157
      %p166 = scmp.eq.s32.totalorder %s22, 0
      %p167 = por %p165, %p166
      %p168 = scmp.ne.s32.totalorder %s156, %s157
      %p169 = scmp.eq.s32.totalorder %s23, 1
      %p170 = por %p168, %p169
      %p172 = scmp.ne.s32.totalorder %s157, %s171
      %p173 = scmp.eq.s32.totalorder %s23, 0
      %p174 = por %p172, %p173
      %s176 = sadd.s32 %s175, 1
      %p179 = scmp.eq.s32.totalorder %s17, 1
      %p180 = scmp.ne.s32.totalorder %s175, %s177
      %p181 = scmp.eq.s32.totalorder %s17, 0
      %p182 = por %p180, %p181
      %p183 = scmp.ne.s32.totalorder %s175, %s177
      %p184 = scmp.eq.s32.totalorder %s22, 1
      %p185 = por %p183, %p184
      %p186 = scmp.ne.s32.totalorder %s177, %s178
      %p187 = scmp.eq.s32.totalorder %s22, 0
      %p188 = por %p186, %p187
      %p189 = scmp.ne.s32.totalorder %s177, %s178
      %p190 = scmp.eq.s32.totalorder %s23, 1
      %p191 = por %p189, %p190
      %p193 = scmp.ne.s32.totalorder %s178, %s192
      %p194 = scmp.eq.s32.totalorder %s23, 0
      %p195 = por %p193, %p194
      %s197 = sadd.s32 %s196, 1
      %p200 = scmp.eq.s32.totalorder %s17, 1
      %p201 = scmp.ne.s32.totalorder %s196, %s198
      %p202 = scmp.eq.s32.totalorder %s17, 0
      %p203 = por %p201, %p202
      %p204 = scmp.ne.s32.totalorder %s196, %s198
      %p205 = scmp.eq.s32.totalorder %s22, 1
      %p206 = por %p204, %p205
      %p207 = scmp.ne.s32.totalorder %s198, %s199
      %p208 = scmp.eq.s32.totalorder %s22, 0
      %p209 = por %p207, %p208
      %p210 = scmp.ne.s32.totalorder %s198, %s199
      %p211 = scmp.eq.s32.totalorder %s23, 1
      %p212 = por %p210, %p211
      %p214 = scmp.ne.s32.totalorder %s199, %s213
      %p215 = scmp.eq.s32.totalorder %s23, 0
      %p216 = por %p214, %p215
      %s217 = ssub.s32 %s24, %s36
      %s218 = ssub.s32 %s25, %s32
      %s219 = sor.u32 %s217, %s218
      %p220 = scmp.eq.s32.totalorder %s219, 0
      %s222 = sadd.s32 %s221, 1
      %s223 = scalar_select %p220, %s221, %s222
      %p226 = pneg %p220
      %p227 = scmp.eq.s32.totalorder %s17, 1
      %p228 = por %p226, %p227
      %p229 = scmp.ne.s32.totalorder %s221, %s224
      %p230 = scmp.eq.s32.totalorder %s17, 0
      %p231 = por %p229, %p230
      %p232 = scmp.ne.s32.totalorder %s221, %s224
      %p233 = scmp.eq.s32.totalorder %s22, 1
      %p234 = por %p232, %p233
      %p235 = scmp.ne.s32.totalorder %s224, %s225
      %p236 = scmp.eq.s32.totalorder %s22, 0
      %p237 = por %p235, %p236
      %p238 = scmp.ne.s32.totalorder %s224, %s225
      %p239 = scmp.eq.s32.totalorder %s23, 1
      %p240 = por %p238, %p239
      %p242 = scmp.ne.s32.totalorder %s225, %s241
      %p243 = scmp.eq.s32.totalorder %s23, 0
      %p244 = por %p242, %p243
      %p245 = scmp.le.s32.totalorder 1, %s17
      %p246 = scmp.lt.s32.totalorder %s17, 3
      %p247 = pnand %p245, %p246
      %p248 = pneg %p247
      // Predicated region
      $region9: #{tpu_custom_call.1} parent=5 // pred_check
        _
      $region10: #{tpu_custom_call.1} parent=5 // pred_check_branch
        %250 = sbr.rel (%p247) target = $region12
      $region11: #{tpu_custom_call.1} parent=5 // pred_region
        %s251 = ssub.s32 %s17, 1
        // Predicated region
        $region13: #{tpu_custom_call.1} parent=11 // pred_check
          %p252 = pneg %p104
        $region14: #{tpu_custom_call.1} parent=11 // pred_check_branch
          %254 = sbr.rel (%p252) target = $region16
        $region15: #{tpu_custom_call.1} parent=11 // pred_region
          _
        $region16: #{tpu_custom_call.1} parent=11 // pred_fallthru
          _
        // Predicated region
        $region17: #{tpu_custom_call.1} parent=11 // pred_check
          %p255 = pneg %p125
        $region18: #{tpu_custom_call.1} parent=11 // pred_check_branch
          %257 = sbr.rel (%p255) target = $region20
        $region19: #{tpu_custom_call.1} parent=11 // pred_region
          _
        $region20: #{tpu_custom_call.1} parent=11 // pred_fallthru
          _
        // Predicated region
        $region21: #{tpu_custom_call.1} parent=11 // pred_check
          %p258 = pneg %p146
        $region22: #{tpu_custom_call.1} parent=11 // pred_check_branch
          %260 = sbr.rel (%p258) target = $region24
        $region23: #{tpu_custom_call.1} parent=11 // pred_region
          _
        $region24: #{tpu_custom_call.1} parent=11 // pred_fallthru
          _
        // Predicated region
        $region25: #{tpu_custom_call.1} parent=11 // pred_check
          %p261 = pneg %p167
        $region26: #{tpu_custom_call.1} parent=11 // pred_check_branch
          %263 = sbr.rel (%p261) target = $region28
        $region27: #{tpu_custom_call.1} parent=11 // pred_region
          _
        $region28: #{tpu_custom_call.1} parent=11 // pred_fallthru
          _
        // Predicated region
        $region29: #{tpu_custom_call.1} parent=11 // pred_check
          %p264 = pneg %p188
        $region30: #{tpu_custom_call.1} parent=11 // pred_check_branch
          %266 = sbr.rel (%p264) target = $region32
        $region31: #{tpu_custom_call.1} parent=11 // pred_region
          _
        $region32: #{tpu_custom_call.1} parent=11 // pred_fallthru
          _
        // Predicated region
        $region33: #{tpu_custom_call.1} parent=11 // pred_check
          %p267 = pneg %p209
        $region34: #{tpu_custom_call.1} parent=11 // pred_check_branch
          %269 = sbr.rel (%p267) target = $region36
        $region35: #{tpu_custom_call.1} parent=11 // pred_region
          _
        $region36: #{tpu_custom_call.1} parent=11 // pred_fallthru
          _
      $region12: #{tpu_custom_call.1} parent=5 // pred_fallthru
        _
      %p270 = scmp.lt.s32.totalorder %s17, 2
      // Predicated region
      $region37: #{tpu_custom_call.1} parent=5 // pred_check
        %p271 = pneg %p270
      $region38: #{tpu_custom_call.1} parent=5 // pred_check_branch
        %273 = sbr.rel (%p271) target = $region40
      $region39: #{tpu_custom_call.1} parent=5 // pred_region
        // Predicated region
        $region41: #{tpu_custom_call.1} parent=39 // pred_check
          %p274 = pneg %p49
        $region42: #{tpu_custom_call.1} parent=39 // pred_check_branch
          %276 = sbr.rel (%p274) target = $region44
        $region43: #{tpu_custom_call.1} parent=39 // pred_region
          %s277 = smul.u32 4, %s24
          %p278 = scmp.lt.s32.totalorder %s277, 7
          %s279 = scalar_select %p278, %s277, 7
          %s280 = smul.addr %s279, 2
          %s281 = smul.addr %s280, 4
          %s282 = scalar_lea.vmem %s0, %s281
          %s283 = smul.u32 4, %s24
        $region44: #{tpu_custom_call.1} parent=39 // pred_fallthru
          _
        // Predicated region
        $region45: #{tpu_custom_call.1} parent=39 // pred_check
          %p284 = pneg %p77
        $region46: #{tpu_custom_call.1} parent=39 // pred_check_branch
          %286 = sbr.rel (%p284) target = $region48
        $region47: #{tpu_custom_call.1} parent=39 // pred_region
          %s287 = smul.u32 4, %s24
          %s288 = smul.u32 2, %s25
          %p289 = scmp.lt.s32.totalorder %s287, 7
          %s290 = scalar_select %p289, %s287, 7
          %p291 = scmp.lt.s32.totalorder %s288, 1
          %s292 = scalar_select %p291, %s288, 1
          %s293 = smul.addr %s290, 2
          %s294 = sadd.s32 %s292, %s293
          %s295 = smul.addr %s294, 4
          %s296 = scalar_lea.vmem %s1, %s295
          %s297 = smul.u32 4, %s24
          %s298 = smul.u32 2, %s25
        $region48: #{tpu_custom_call.1} parent=39 // pred_fallthru
          _
      $region40: #{tpu_custom_call.1} parent=5 // pred_fallthru
        _
      %p299 = scmp.le.s32.totalorder 1, %s17
      %p300 = scmp.lt.s32.totalorder %s17, 3
      %p301 = pnand %p299, %p300
      %p302 = pneg %p301
      // Predicated region
      $region49: #{tpu_custom_call.1} parent=5 // pred_check
        _
      $region50: #{tpu_custom_call.1} parent=5 // pred_check_branch
        %304 = sbr.rel (%p301) target = $region52
      $region51: #{tpu_custom_call.1} parent=5 // pred_region
        %s305 = ssub.s32 %s17, 1
        %s306 = smul.u32 4, %s26
        %p307 = scmp.lt.s32.totalorder %s306, 7
        %s308 = scalar_select %p307, %s306, 7
        %s309 = smul.addr %s308, 2
        %s310 = smul.addr %s309, 4
        %s311 = scalar_lea.vmem %s0, %s310
        %p312 = pneg %p55
        %p313 = pneg %p52
        %s314 = smul.u32 4, %s26
        %s315 = smul.u32 2, %s27
        %p316 = scmp.lt.s32.totalorder %s314, 7
        %s317 = scalar_select %p316, %s314, 7
        %p318 = scmp.lt.s32.totalorder %s315, 1
        %s319 = scalar_select %p318, %s315, 1
        %s320 = smul.addr %s317, 2
        %s321 = sadd.s32 %s319, %s320
        %s322 = smul.addr %s321, 4
        %s323 = scalar_lea.vmem %s1, %s322
        %p324 = pneg %p83
        %p325 = pneg %p80
        %p326 = pneg %p104
        %p327 = pneg %p101
        %p328 = pneg %p125
        %p329 = pneg %p122
        %p330 = pneg %p146
        %p331 = pneg %p143
        %p332 = pneg %p167
        %p333 = pneg %p164
        %p334 = pneg %p188
        %p335 = pneg %p185
        %p336 = pneg %p209
        %p337 = pneg %p206
        %p338 = pneg %p237
        %p339 = pneg %p234
        %s340 = sand.u32 %s224, 1
        %s341 = scalar_lea.sflag [#allocation3], %s340
        %s342 = sand.u32 %s224, 1
        %s343 = smul.addr %s342, 64
        %s344 = scalar_lea.vmem [#allocation2], %s343
        %s345 = smul.u32 4, %s26
        %p346 = scmp.lt.s32.totalorder %s345, 7
        %s347 = scalar_select %p346, %s345, 7
        %s348 = smul.addr %s347, 2
        %s349 = smul.addr %s348, 4
        %s350 = scalar_lea.vmem %s0, %s349
        %s351 = smul.u32 4, %s26
        %s352 = smul.u32 4, %s26
        %s353 = smul.u32 2, %s27
        %p354 = scmp.lt.s32.totalorder %s352, 7
        %s355 = scalar_select %p354, %s352, 7
        %p356 = scmp.lt.s32.totalorder %s353, 1
        %s357 = scalar_select %p356, %s353, 1
        %s358 = smul.addr %s355, 2
        %s359 = sadd.s32 %s357, %s358
        %s360 = smul.addr %s359, 4
        %s361 = scalar_lea.vmem %s1, %s360
        %s362 = smul.u32 4, %s26
        %s363 = smul.u32 2, %s27
        %s364 = smul.u32 4, %s26
        %s365 = smul.u32 2, %s27
        %v367 = vld [vmem:[%s350] sm:$0xf]
        %v368 = vld [vmem:[%s350 + $0x4] sm:$0xf]
        %v369 = vld [vmem:[%s350 + $0x8] sm:$0xf]
        %v370 = vld [vmem:[%s350 + $0xc] sm:$0xf]
        %v371 = vld [vmem:[%s350 + $0x10] sm:$0xf]
        %v372 = vld [vmem:[%s350 + $0x14] sm:$0xf]
        %v373 = vld [vmem:[%s350 + $0x18] sm:$0xf]
        %v374 = vld [vmem:[%s350 + $0x1c] sm:$0xf]
        %v375 = vld [vmem:[%s361] sm:$0xf]
        %v376 = vld [vmem:[%s361 + $0x4] sm:$0xf]
        %v377 = vld [vmem:[%s361 + $0x8] sm:$0xf]
        %v378 = vld [vmem:[%s361 + $0xc] sm:$0xf]
        %v379 = vld [vmem:[%s361 + $0x10] sm:$0xf]
        %v380 = vld [vmem:[%s361 + $0x14] sm:$0xf]
        %v381 = vld [vmem:[%s361 + $0x18] sm:$0xf]
        %v382 = vld [vmem:[%s361 + $0x1c] sm:$0xf]
        %v385 = vunpack.c.l.b16 %v375
        %v386 = vunpack.c.l.b16 %v376
        %v387 = vpack.c.b16 %v386, %v385
        %v390 = vunpack.c.l.b16 %v367
        %v391 = vunpack.c.l.b16 %v368
        %v392 = vpack.c.b16 %v391, %v390
        %vm394 = vcmask 130048
        %v396 = vsel %vm394, %v387, 0
        %398 = vmatprep.subr.bf16.mxu0 0
        %399 = vmatpush1.bf16.msra.mxu0 %v392
        %400 = vmatprep.subr.bf16.mxu0 0
        %401 = vmatpush1.bf16.msra.mxu0 0
        %402 = vmatprep.subr.bf16.mxu0 0
        %403 = vmatpush1.bf16.msra.mxu0 0
        %404 = vmatprep.subr.bf16.mxu0 0
        %405 = vmatpush1.bf16.msra.mxu0 0
        %406 = vmatprep.subr.bf16.mxu0 0
        %407 = vmatpush1.bf16.msra.mxu0 0
        %408 = vmatprep.subr.bf16.mxu0 0
        %409 = vmatpush1.bf16.msra.mxu0 0
        %410 = vmatprep.subr.bf16.mxu0 0
        %411 = vmatpush1.bf16.msra.mxu0 0
        %412 = vmatprep.subr.bf16.mxu0 0
        %413 = vmatpush1.bf16.msra.mxu0 0
        %414 = vmatprep.subr.bf16.mxu0 0
        %415 = vmatpush1.bf16.msra.mxu0 0
        %416 = vmatprep.subr.bf16.mxu0 0
        %417 = vmatpush1.bf16.msra.mxu0 0
        %418 = vmatprep.subr.bf16.mxu0 0
        %419 = vmatpush1.bf16.msra.mxu0 0
        %420 = vmatprep.subr.bf16.mxu0 0
        %421 = vmatpush1.bf16.msra.mxu0 0
        %422 = vmatprep.subr.bf16.mxu0 0
        %423 = vmatpush1.bf16.msra.mxu0 0
        %424 = vmatprep.subr.bf16.mxu0 0
        %425 = vmatpush1.bf16.msra.mxu0 0
        %426 = vmatprep.subr.bf16.mxu0 0
        %427 = vmatpush1.bf16.msra.mxu0 0
        %428 = vmatprep.subr.bf16.mxu0 0
        %429 = vmatpush1.bf16.msra.mxu0 0
        %430 = vmatprep.mubr.bf16.mxu0 0
        %431 = vmatmul.mubr.bf16.gmra.mrb[0].mxu0 %v396
        %v432 = vpop.f32.mrb[0].mxu0
        %v433 = vadd.f32 0.0, %v432
        %v434 = vpop.f32.mrb[0].mxu0
        %v435 = vpop.f32.mrb[0].mxu0
        %v436 = vadd.f32 0.0, %v435
        %v437 = vpop.f32.mrb[0].mxu0
        %438 = vdwg.mxu0
        %v441 = vunpack.c.l.b16 %v377
        %v442 = vunpack.c.l.b16 %v378
        %v443 = vpack.c.b16 %v442, %v441
        %v446 = vunpack.c.l.b16 %v369
        %v447 = vunpack.c.l.b16 %v370
        %v448 = vpack.c.b16 %v447, %v446
        %v451 = vsel %vm394, %v443, 0
        %453 = vmatprep.subr.bf16.mxu0 0
        %454 = vmatpush1.bf16.msra.mxu0 %v448
        %455 = vmatprep.subr.bf16.mxu0 0
        %456 = vmatpush1.bf16.msra.mxu0 0
        %457 = vmatprep.subr.bf16.mxu0 0
        %458 = vmatpush1.bf16.msra.mxu0 0
        %459 = vmatprep.subr.bf16.mxu0 0
        %460 = vmatpush1.bf16.msra.mxu0 0
        %461 = vmatprep.subr.bf16.mxu0 0
        %462 = vmatpush1.bf16.msra.mxu0 0
        %463 = vmatprep.subr.bf16.mxu0 0
        %464 = vmatpush1.bf16.msra.mxu0 0
        %465 = vmatprep.subr.bf16.mxu0 0
        %466 = vmatpush1.bf16.msra.mxu0 0
        %467 = vmatprep.subr.bf16.mxu0 0
        %468 = vmatpush1.bf16.msra.mxu0 0
        %469 = vmatprep.subr.bf16.mxu0 0
        %470 = vmatpush1.bf16.msra.mxu0 0
        %471 = vmatprep.subr.bf16.mxu0 0
        %472 = vmatpush1.bf16.msra.mxu0 0
        %473 = vmatprep.subr.bf16.mxu0 0
        %474 = vmatpush1.bf16.msra.mxu0 0
        %475 = vmatprep.subr.bf16.mxu0 0
        %476 = vmatpush1.bf16.msra.mxu0 0
        %477 = vmatprep.subr.bf16.mxu0 0
        %478 = vmatpush1.bf16.msra.mxu0 0
        %479 = vmatprep.subr.bf16.mxu0 0
        %480 = vmatpush1.bf16.msra.mxu0 0
        %481 = vmatprep.subr.bf16.mxu0 0
        %482 = vmatpush1.bf16.msra.mxu0 0
        %483 = vmatprep.subr.bf16.mxu0 0
        %484 = vmatpush1.bf16.msra.mxu0 0
        %485 = vmatprep.mubr.bf16.mxu0 0
        %486 = vmatmul.mubr.bf16.gmra.mrb[0].mxu0 %v451
        %v487 = vpop.f32.mrb[0].mxu0
        %v488 = vadd.f32 0.0, %v487
        %v489 = vpop.f32.mrb[0].mxu0
        %v490 = vpop.f32.mrb[0].mxu0
        %v491 = vadd.f32 0.0, %v490
        %v492 = vpop.f32.mrb[0].mxu0
        %493 = vdwg.mxu0
        %v496 = vunpack.c.l.b16 %v379
        %v497 = vunpack.c.l.b16 %v380
        %v498 = vpack.c.b16 %v497, %v496
        %v501 = vunpack.c.l.b16 %v371
        %v502 = vunpack.c.l.b16 %v372
        %v503 = vpack.c.b16 %v502, %v501
        %v506 = vsel %vm394, %v498, 0
        %508 = vmatprep.subr.bf16.mxu0 0
        %509 = vmatpush1.bf16.msra.mxu0 %v503
        %510 = vmatprep.subr.bf16.mxu0 0
        %511 = vmatpush1.bf16.msra.mxu0 0
        %512 = vmatprep.subr.bf16.mxu0 0
        %513 = vmatpush1.bf16.msra.mxu0 0
        %514 = vmatprep.subr.bf16.mxu0 0
        %515 = vmatpush1.bf16.msra.mxu0 0
        %516 = vmatprep.subr.bf16.mxu0 0
        %517 = vmatpush1.bf16.msra.mxu0 0
        %518 = vmatprep.subr.bf16.mxu0 0
        %519 = vmatpush1.bf16.msra.mxu0 0
        %520 = vmatprep.subr.bf16.mxu0 0
        %521 = vmatpush1.bf16.msra.mxu0 0
        %522 = vmatprep.subr.bf16.mxu0 0
        %523 = vmatpush1.bf16.msra.mxu0 0
        %524 = vmatprep.subr.bf16.mxu0 0
        %525 = vmatpush1.bf16.msra.mxu0 0
        %526 = vmatprep.subr.bf16.mxu0 0
        %527 = vmatpush1.bf16.msra.mxu0 0
        %528 = vmatprep.subr.bf16.mxu0 0
        %529 = vmatpush1.bf16.msra.mxu0 0
        %530 = vmatprep.subr.bf16.mxu0 0
        %531 = vmatpush1.bf16.msra.mxu0 0
        %532 = vmatprep.subr.bf16.mxu0 0
        %533 = vmatpush1.bf16.msra.mxu0 0
        %534 = vmatprep.subr.bf16.mxu0 0
        %535 = vmatpush1.bf16.msra.mxu0 0
        %536 = vmatprep.subr.bf16.mxu0 0
        %537 = vmatpush1.bf16.msra.mxu0 0
        %538 = vmatprep.subr.bf16.mxu0 0
        %539 = vmatpush1.bf16.msra.mxu0 0
        %540 = vmatprep.mubr.bf16.mxu0 0
        %541 = vmatmul.mubr.bf16.gmra.mrb[0].mxu0 %v506
        %v542 = vpop.f32.mrb[0].mxu0
        %v543 = vadd.f32 0.0, %v542
        %v544 = vpop.f32.mrb[0].mxu0
        %v545 = vpop.f32.mrb[0].mxu0
        %v546 = vadd.f32 0.0, %v545
        %v547 = vpop.f32.mrb[0].mxu0
        %548 = vdwg.mxu0
        %v551 = vunpack.c.l.b16 %v381
        %v552 = vunpack.c.l.b16 %v382
        %v553 = vpack.c.b16 %v552, %v551
        %v556 = vunpack.c.l.b16 %v373
        %v557 = vunpack.c.l.b16 %v374
        %v558 = vpack.c.b16 %v557, %v556
        %v561 = vsel %vm394, %v553, 0
        %563 = vmatprep.subr.bf16.mxu0 0
        %564 = vmatpush1.bf16.msra.mxu0 %v558
        %565 = vmatprep.subr.bf16.mxu0 0
        %566 = vmatpush1.bf16.msra.mxu0 0
        %567 = vmatprep.subr.bf16.mxu0 0
        %568 = vmatpush1.bf16.msra.mxu0 0
        %569 = vmatprep.subr.bf16.mxu0 0
        %570 = vmatpush1.bf16.msra.mxu0 0
        %571 = vmatprep.subr.bf16.mxu0 0
        %572 = vmatpush1.bf16.msra.mxu0 0
        %573 = vmatprep.subr.bf16.mxu0 0
        %574 = vmatpush1.bf16.msra.mxu0 0
        %575 = vmatprep.subr.bf16.mxu0 0
        %576 = vmatpush1.bf16.msra.mxu0 0
        %577 = vmatprep.subr.bf16.mxu0 0
        %578 = vmatpush1.bf16.msra.mxu0 0
        %579 = vmatprep.subr.bf16.mxu0 0
        %580 = vmatpush1.bf16.msra.mxu0 0
        %581 = vmatprep.subr.bf16.mxu0 0
        %582 = vmatpush1.bf16.msra.mxu0 0
        %583 = vmatprep.subr.bf16.mxu0 0
        %584 = vmatpush1.bf16.msra.mxu0 0
        %585 = vmatprep.subr.bf16.mxu0 0
        %586 = vmatpush1.bf16.msra.mxu0 0
        %587 = vmatprep.subr.bf16.mxu0 0
        %588 = vmatpush1.bf16.msra.mxu0 0
        %589 = vmatprep.subr.bf16.mxu0 0
        %590 = vmatpush1.bf16.msra.mxu0 0
        %591 = vmatprep.subr.bf16.mxu0 0
        %592 = vmatpush1.bf16.msra.mxu0 0
        %593 = vmatprep.subr.bf16.mxu0 0
        %594 = vmatpush1.bf16.msra.mxu0 0
        %595 = vmatprep.mubr.bf16.mxu0 0
        %596 = vmatmul.mubr.bf16.gmra.mrb[0].mxu0 %v561
        %v597 = vpop.f32.mrb[0].mxu0
        %v598 = vadd.f32 0.0, %v597
        %v599 = vpop.f32.mrb[0].mxu0
        %v600 = vpop.f32.mrb[0].mxu0
        %v601 = vadd.f32 0.0, %v600
        %v602 = vpop.f32.mrb[0].mxu0
        %603 = vdwg.mxu0
        %v604 = vpack.c.bf16 %v436, %v433
        %v605 = vpack.c.bf16 %v491, %v488
        %v606 = vpack.c.bf16 %v546, %v543
        %v607 = vpack.c.bf16 %v601, %v598
        %v608 = vld [vmem:[%s2] sm:$0xf]
        %v609 = vld [vmem:[%s3] sm:$0x3]
        %v611 = vlaneseq
        %v612 = vshrl.u32 %v611, 7
        %v613 = vsub.s32 0, %v612
        %v614 = vrot.slane %v609, %v613
        %v615 = vlaneseq
        %v616 = vshrl.u32 %v615, 7
        %v617 = vsub.s32 1, %v616
        %v618 = vrot.slane %v609, %v617
        %v623 = vunpack.c.l.s4 1983009808
        %v624 = vunpack.c.0.s8 %v623
        %v625 = vlaneseq
        %v626 = vshrl.u32 %v625, 7
        %v627 = vsub.s32 %v624, %v626
        %v628 = vrot.slane %v608, %v627
        %v629 = vcombine.high %v628, %v628
        %vm630 = vcmask 31744
        %v632 = vsel %vm630, %v604, 0
        %v635 = vsel %vm630, %v605, 0
        %v638 = vsel %vm630, %v606, 0
        %v641 = vsel %vm630, %v607, 0
        %vm643 = vcmask 1041408
        %v645 = vsel %vm643, %v628, 0
        %v648 = vsel %vm643, %v629, 0
        %650 = vmatprep.subr.bf16.mxu0 %v648
        %651 = vmatpush1.bf16.msra.mxu0 %v645
        %652 = vmatprep.subr.bf16.mxu0 0
        %653 = vmatpush1.bf16.msra.mxu0 0
        %654 = vmatprep.subr.bf16.mxu0 0
        %655 = vmatpush1.bf16.msra.mxu0 0
        %656 = vmatprep.subr.bf16.mxu0 0
        %657 = vmatpush1.bf16.msra.mxu0 0
        %658 = vmatprep.subr.bf16.mxu0 0
        %659 = vmatpush1.bf16.msra.mxu0 0
        %660 = vmatprep.subr.bf16.mxu0 0
        %661 = vmatpush1.bf16.msra.mxu0 0
        %662 = vmatprep.subr.bf16.mxu0 0
        %663 = vmatpush1.bf16.msra.mxu0 0
        %664 = vmatprep.subr.bf16.mxu0 0
        %665 = vmatpush1.bf16.msra.mxu0 0
        %666 = vmatprep.subr.bf16.mxu0 0
        %667 = vmatpush1.bf16.msra.mxu0 0
        %668 = vmatprep.subr.bf16.mxu0 0
        %669 = vmatpush1.bf16.msra.mxu0 0
        %670 = vmatprep.subr.bf16.mxu0 0
        %671 = vmatpush1.bf16.msra.mxu0 0
        %672 = vmatprep.subr.bf16.mxu0 0
        %673 = vmatpush1.bf16.msra.mxu0 0
        %674 = vmatprep.subr.bf16.mxu0 0
        %675 = vmatpush1.bf16.msra.mxu0 0
        %676 = vmatprep.subr.bf16.mxu0 0
        %677 = vmatpush1.bf16.msra.mxu0 0
        %678 = vmatprep.subr.bf16.mxu0 0
        %679 = vmatpush1.bf16.msra.mxu0 0
        %680 = vmatprep.subr.bf16.mxu0 0
        %681 = vmatpush1.bf16.msra.mxu0 0
        %682 = vmatprep.mubr.bf16.mxu0 0
        %683 = vmatmul.mubr.bf16.gmra.mrb[0].mxu0 %v632
        %v684 = vpop.f32.mrb[0].mxu0
        %v685 = vadd.f32 %v614, %v684
        %v686 = vpop.f32.mrb[0].mxu0
        %v687 = vadd.f32 %v618, %v686
        %v688 = vpop.f32.mrb[0].mxu0
        %v689 = vadd.f32 %v614, %v688
        %v690 = vpop.f32.mrb[0].mxu0
        %v691 = vadd.f32 %v618, %v690
        %692 = vmatprep.mubr.bf16.mxu0 0
        %693 = vmatmul.mubr.bf16.gmra.mrb[0].mxu0 %v635
        %v694 = vpop.f32.mrb[0].mxu0
        %v695 = vadd.f32 %v614, %v694
        %v696 = vpop.f32.mrb[0].mxu0
        %v697 = vadd.f32 %v618, %v696
        %v698 = vpop.f32.mrb[0].mxu0
        %v699 = vadd.f32 %v614, %v698
        %v700 = vpop.f32.mrb[0].mxu0
        %v701 = vadd.f32 %v618, %v700
        %702 = vmatprep.mubr.bf16.mxu0 0
        %703 = vmatmul.mubr.bf16.gmra.mrb[0].mxu0 %v638
        %v704 = vpop.f32.mrb[0].mxu0
        %v705 = vadd.f32 %v614, %v704
        %v706 = vpop.f32.mrb[0].mxu0
        %v707 = vadd.f32 %v618, %v706
        %v708 = vpop.f32.mrb[0].mxu0
        %v709 = vadd.f32 %v614, %v708
        %v710 = vpop.f32.mrb[0].mxu0
        %v711 = vadd.f32 %v618, %v710
        %712 = vmatprep.mubr.bf16.mxu0 0
        %713 = vmatmul.mubr.bf16.gmra.mrb[0].mxu0 %v641
        %v714 = vpop.f32.mrb[0].mxu0
        %v715 = vadd.f32 %v614, %v714
        %v716 = vpop.f32.mrb[0].mxu0
        %v717 = vadd.f32 %v618, %v716
        %v718 = vpop.f32.mrb[0].mxu0
        %v719 = vadd.f32 %v614, %v718
        %v720 = vpop.f32.mrb[0].mxu0
        %v721 = vadd.f32 %v618, %v720
        %722 = vdwg.mxu0
        %v723 = vmax.f32 %v687, 0.0
        %v724 = vmax.f32 %v691, 0.0
        %v725 = vmax.f32 %v697, 0.0
        %v726 = vmax.f32 %v701, 0.0
        %v727 = vmax.f32 %v707, 0.0
        %v728 = vmax.f32 %v711, 0.0
        %v729 = vmax.f32 %v717, 0.0
        %v730 = vmax.f32 %v721, 0.0
        %v731 = vpack.c.bf16 %v724, %v723
        %v732 = vpack.c.bf16 %v726, %v725
        %v733 = vpack.c.bf16 %v728, %v727
        %v734 = vpack.c.bf16 %v730, %v729
        %v735 = vld [vmem:[%s4] sm:$0xf]
        %v736 = vld [vmem:[%s4 + $0x4] sm:$0xf]
        %v737 = vld [vmem:[%s4 + $0x8] sm:$0xf]
        %v738 = vld [vmem:[%s4 + $0xc] sm:$0xf]
        %v739 = vld [vmem:[%s5] sm:$0x1]
        %v741 = vlaneseq
        %v742 = vshrl.u32 %v741, 7
        %v743 = vsub.s32 0, %v742
        %v744 = vrot.slane %v739, %v743
        %v750 = vunpack.c.l.b16 %v735
        %v751 = vunpack.c.l.b16 %v736
        %v752 = vunpack.c.l.b16 %v737
        %v753 = vunpack.c.l.b16 %v738
        %v754 = vpack.c.b16 %v751, %v750
        %v755 = vpack.c.b16 %v753, %v752
        %vm758 = vcmask 261120
        %v760 = vsel %vm758, %v731, 0
        %v763 = vsel %vm758, %v732, 0
        %v766 = vsel %vm758, %v733, 0
        %v769 = vsel %vm758, %v734, 0
        %771 = vmatprep.subr.bf16.mxu0 0
        %772 = vmatpush1.bf16.msra.mxu0 %v754
        %773 = vmatprep.subr.bf16.mxu0 0
        %774 = vmatpush1.bf16.msra.mxu0 %v755
        %775 = vmatprep.subr.bf16.mxu0 0
        %776 = vmatpush1.bf16.msra.mxu0 0
        %777 = vmatprep.subr.bf16.mxu0 0
        %778 = vmatpush1.bf16.msra.mxu0 0
        %779 = vmatprep.subr.bf16.mxu0 0
        %780 = vmatpush1.bf16.msra.mxu0 0
        %781 = vmatprep.subr.bf16.mxu0 0
        %782 = vmatpush1.bf16.msra.mxu0 0
        %783 = vmatprep.subr.bf16.mxu0 0
        %784 = vmatpush1.bf16.msra.mxu0 0
        %785 = vmatprep.subr.bf16.mxu0 0
        %786 = vmatpush1.bf16.msra.mxu0 0
        %787 = vmatprep.subr.bf16.mxu0 0
        %788 = vmatpush1.bf16.msra.mxu0 0
        %789 = vmatprep.subr.bf16.mxu0 0
        %790 = vmatpush1.bf16.msra.mxu0 0
        %791 = vmatprep.subr.bf16.mxu0 0
        %792 = vmatpush1.bf16.msra.mxu0 0
        %793 = vmatprep.subr.bf16.mxu0 0
        %794 = vmatpush1.bf16.msra.mxu0 0
        %795 = vmatprep.subr.bf16.mxu0 0
        %796 = vmatpush1.bf16.msra.mxu0 0
        %797 = vmatprep.subr.bf16.mxu0 0
        %798 = vmatpush1.bf16.msra.mxu0 0
        %799 = vmatprep.subr.bf16.mxu0 0
        %800 = vmatpush1.bf16.msra.mxu0 0
        %801 = vmatprep.subr.bf16.mxu0 0
        %802 = vmatpush1.bf16.msra.mxu0 0
        %803 = vmatprep.mubr.bf16.mxu0 0
        %804 = vmatmul.mubr.bf16.gmra.mrb[0].mxu0 %v760
        %v805 = vpop.f32.mrb[0].mxu0
        %v806 = vadd.f32 %v744, %v805
        %v807 = vpop.f32.mrb[0].mxu0
        %v808 = vpop.f32.mrb[0].mxu0
        %v809 = vadd.f32 %v744, %v808
        %v810 = vpop.f32.mrb[0].mxu0
        %811 = vmatprep.mubr.bf16.mxu0 0
        %812 = vmatmul.mubr.bf16.gmra.mrb[0].mxu0 %v763
        %v813 = vpop.f32.mrb[0].mxu0
        %v814 = vadd.f32 %v744, %v813
        %v815 = vpop.f32.mrb[0].mxu0
        %v816 = vpop.f32.mrb[0].mxu0
        %v817 = vadd.f32 %v744, %v816
        %v818 = vpop.f32.mrb[0].mxu0
        %819 = vmatprep.mubr.bf16.mxu0 0
        %820 = vmatmul.mubr.bf16.gmra.mrb[0].mxu0 %v766
        %v821 = vpop.f32.mrb[0].mxu0
        %v822 = vadd.f32 %v744, %v821
        %v823 = vpop.f32.mrb[0].mxu0
        %v824 = vpop.f32.mrb[0].mxu0
        %v825 = vadd.f32 %v744, %v824
        %v826 = vpop.f32.mrb[0].mxu0
        %827 = vmatprep.mubr.bf16.mxu0 0
        %828 = vmatmul.mubr.bf16.gmra.mrb[0].mxu0 %v769
        %v829 = vpop.f32.mrb[0].mxu0
        %v830 = vadd.f32 %v744, %v829
        %v831 = vpop.f32.mrb[0].mxu0
        %v832 = vpop.f32.mrb[0].mxu0
        %v833 = vadd.f32 %v744, %v832
        %v834 = vpop.f32.mrb[0].mxu0
        %835 = vdwg.mxu0
        %v836 = vunpack.c.l.bf16 %v367
        %v837 = vunpack.c.l.bf16 %v368
        %v838 = vunpack.c.l.bf16 %v369
        %v839 = vunpack.c.l.bf16 %v370
        %v840 = vunpack.c.l.bf16 %v371
        %v841 = vunpack.c.l.bf16 %v372
        %v842 = vunpack.c.l.bf16 %v373
        %v843 = vunpack.c.l.bf16 %v374
        %v844 = vsel %vm630, %v836, 0.0
        %v845 = vsel %vm630, %v837, 0.0
        %v846 = vadd.f32 %v844, %v845
        %v847 = vrot.slane %v846, 4
        %v848 = vadd.f32 %v846, %v847
        %v849 = vrot.slane %v848, 2
        %v850 = vadd.f32 %v848, %v849
        %v851 = vrot.slane %v850, 1
        %v852 = vadd.f32 %v850, %v851
        %v853 = vsel %vm630, %v838, 0.0
        %v854 = vsel %vm630, %v839, 0.0
        %v855 = vadd.f32 %v853, %v854
        %v856 = vrot.slane %v855, 4
        %v857 = vadd.f32 %v855, %v856
        %v858 = vrot.slane %v857, 2
        %v859 = vadd.f32 %v857, %v858
        %v860 = vrot.slane %v859, 1
        %v861 = vadd.f32 %v859, %v860
        %v862 = vsel %vm630, %v840, 0.0
        %v863 = vsel %vm630, %v841, 0.0
        %v864 = vadd.f32 %v862, %v863
        %v865 = vrot.slane %v864, 4
        %v866 = vadd.f32 %v864, %v865
        %v867 = vrot.slane %v866, 2
        %v868 = vadd.f32 %v866, %v867
        %v869 = vrot.slane %v868, 1
        %v870 = vadd.f32 %v868, %v869
        %v871 = vsel %vm630, %v842, 0.0
        %v872 = vsel %vm630, %v843, 0.0
        %v873 = vadd.f32 %v871, %v872
        %v874 = vrot.slane %v873, 4
        %v875 = vadd.f32 %v873, %v874
        %v876 = vrot.slane %v875, 2
        %v877 = vadd.f32 %v875, %v876
        %v878 = vrot.slane %v877, 1
        %v879 = vadd.f32 %v877, %v878
        %v880 = vpack.c.bf16 %v852, %v852
        %v881 = vpack.c.bf16 %v861, %v861
        %v882 = vpack.c.bf16 %v870, %v870
        %v883 = vpack.c.bf16 %v879, %v879
        %v884 = vld [vmem:[%s6] sm:$0xf]
        %v885 = vld [vmem:[%s7] sm:$0x3]
        %v887 = vlaneseq
        %v888 = vshrl.u32 %v887, 7
        %v889 = vsub.s32 0, %v888
        %v890 = vrot.slane %v885, %v889
        %v891 = vlaneseq
        %v892 = vshrl.u32 %v891, 7
        %v893 = vsub.s32 1, %v892
        %v894 = vrot.slane %v885, %v893
        %v901 = vunpack.c.l.b16 %v880
        %v902 = vunpack.c.l.b16 %v881
        %v903 = vunpack.c.l.b16 %v882
        %v904 = vunpack.c.l.b16 %v883
        %vm905 = vcmask 1041409
        %v906 = vsel %vm905, %v902, %v901
        %vm907 = vcmask 1042434
        %v908 = vsel %vm907, %v903, %v906
        %vm909 = vcmask 1043459
        %v910 = vsel %vm909, %v904, %v908
        %v911 = vpack.c.b16 %v910, %v910
        %v914 = vunpack.c.l.s4 1983009808
        %v915 = vunpack.c.0.s8 %v914
        %v916 = vlaneseq
        %v917 = vshrl.u32 %v916, 7
        %v918 = vsub.s32 %v915, %v917
        %v919 = vrot.slane %v884, %v918
        %v920 = vcombine.high %v919, %v919
        %v922 = vsel %vm630, %v911, 0
        %v925 = vsel %vm643, %v919, 0
        %v928 = vsel %vm643, %v920, 0
        %930 = vmatprep.subr.bf16.mxu0 %v928
        %931 = vmatpush1.bf16.msra.mxu0 %v925
        %932 = vmatprep.subr.bf16.mxu0 0
        %933 = vmatpush1.bf16.msra.mxu0 0
        %934 = vmatprep.subr.bf16.mxu0 0
        %935 = vmatpush1.bf16.msra.mxu0 0
        %936 = vmatprep.subr.bf16.mxu0 0
        %937 = vmatpush1.bf16.msra.mxu0 0
        %938 = vmatprep.subr.bf16.mxu0 0
        %939 = vmatpush1.bf16.msra.mxu0 0
        %940 = vmatprep.subr.bf16.mxu0 0
        %941 = vmatpush1.bf16.msra.mxu0 0
        %942 = vmatprep.subr.bf16.mxu0 0
        %943 = vmatpush1.bf16.msra.mxu0 0
        %944 = vmatprep.subr.bf16.mxu0 0
        %945 = vmatpush1.bf16.msra.mxu0 0
        %946 = vmatprep.subr.bf16.mxu0 0
        %947 = vmatpush1.bf16.msra.mxu0 0
        %948 = vmatprep.subr.bf16.mxu0 0
        %949 = vmatpush1.bf16.msra.mxu0 0
        %950 = vmatprep.subr.bf16.mxu0 0
        %951 = vmatpush1.bf16.msra.mxu0 0
        %952 = vmatprep.subr.bf16.mxu0 0
        %953 = vmatpush1.bf16.msra.mxu0 0
        %954 = vmatprep.subr.bf16.mxu0 0
        %955 = vmatpush1.bf16.msra.mxu0 0
        %956 = vmatprep.subr.bf16.mxu0 0
        %957 = vmatpush1.bf16.msra.mxu0 0
        %958 = vmatprep.subr.bf16.mxu0 0
        %959 = vmatpush1.bf16.msra.mxu0 0
        %960 = vmatprep.subr.bf16.mxu0 0
        %961 = vmatpush1.bf16.msra.mxu0 0
        %962 = vmatprep.mubr.bf16.mxu0 0
        %963 = vmatmul.mubr.bf16.gmra.mrb[0].mxu0 %v922
        %v964 = vpop.f32.mrb[0].mxu0
        %v965 = vadd.f32 %v890, %v964
        %v966 = vpop.f32.mrb[0].mxu0
        %v967 = vadd.f32 %v894, %v966
        %v968 = vpop.f32.mrb[0].mxu0
        %v969 = vpop.f32.mrb[0].mxu0
        %970 = vdwg.mxu0
        %v973 = vunpack.c.l.s4 1966171168
        %v974 = vunpack.c.0.s8 %v973
        %v975 = vlaneseq
        %v976 = vshrl.u32 %v975, 7
        %v977 = vsub.s32 %v974, %v976
        %v978 = vrot.slane %v965, %v977
        %v979 = vcombine.high %v978, %v978
        %v981 = vunpack.c.l.s4 1966171168
        %v982 = vunpack.c.0.s8 %v981
        %v983 = vlaneseq
        %v984 = vshrl.u32 %v983, 7
        %v985 = vsub.s32 %v982, %v984
        %v986 = vrot.slane %v978, %v985
        %v988 = vunpack.c.l.s4 1966171168
        %v989 = vunpack.c.0.s8 %v988
        %v990 = vlaneseq
        %v991 = vshrl.u32 %v990, 7
        %v992 = vsub.s32 %v989, %v991
        %v993 = vrot.slane %v979, %v992
        %v994 = vcombine.high %v986, %v986
        %v995 = vcombine.high %v993, %v993
        %v996 = vlaneseq
        %v997 = vshrl.u32 %v996, 7
        %v998 = vsub.s32 0, %v997
        %v999 = vrot.slane %v986, %v998
        %v1000 = vlaneseq
        %v1001 = vshrl.u32 %v1000, 7
        %v1002 = vsub.s32 0, %v1001
        %v1003 = vrot.slane %v993, %v1002
        %v1004 = vlaneseq
        %v1005 = vshrl.u32 %v1004, 7
        %v1006 = vsub.s32 0, %v1005
        %v1007 = vrot.slane %v994, %v1006
        %v1008 = vlaneseq
        %v1009 = vshrl.u32 %v1008, 7
        %v1010 = vsub.s32 0, %v1009
        %v1011 = vrot.slane %v995, %v1010
        %v1016 = vadd.f32 %v806, %v999
        %v1017 = vadd.f32 %v809, %v999
        %v1018 = vadd.f32 %v814, %v1003
        %v1019 = vadd.f32 %v817, %v1003
        %v1020 = vadd.f32 %v822, %v1007
        %v1021 = vadd.f32 %v825, %v1007
        %v1022 = vadd.f32 %v830, %v1011
        %v1023 = vadd.f32 %v833, %v1011
        %v1026 = vunpack.c.l.s4 1966171168
        %v1027 = vunpack.c.0.s8 %v1026
        %v1028 = vlaneseq
        %v1029 = vshrl.u32 %v1028, 7
        %v1030 = vsub.s32 %v1027, %v1029
        %v1031 = vrot.slane %v967, %v1030
        %v1032 = vcombine.high %v1031, %v1031
        %v1034 = vunpack.c.l.s4 1966171168
        %v1035 = vunpack.c.0.s8 %v1034
        %v1036 = vlaneseq
        %v1037 = vshrl.u32 %v1036, 7
        %v1038 = vsub.s32 %v1035, %v1037
        %v1039 = vrot.slane %v1031, %v1038
        %v1041 = vunpack.c.l.s4 1966171168
        %v1042 = vunpack.c.0.s8 %v1041
        %v1043 = vlaneseq
        %v1044 = vshrl.u32 %v1043, 7
        %v1045 = vsub.s32 %v1042, %v1044
        %v1046 = vrot.slane %v1032, %v1045
        %v1047 = vcombine.high %v1039, %v1039
        %v1048 = vcombine.high %v1046, %v1046
        %v1049 = vlaneseq
        %v1050 = vshrl.u32 %v1049, 7
        %v1051 = vsub.s32 0, %v1050
        %v1052 = vrot.slane %v1039, %v1051
        %v1053 = vlaneseq
        %v1054 = vshrl.u32 %v1053, 7
        %v1055 = vsub.s32 0, %v1054
        %v1056 = vrot.slane %v1046, %v1055
        %v1057 = vlaneseq
        %v1058 = vshrl.u32 %v1057, 7
        %v1059 = vsub.s32 0, %v1058
        %v1060 = vrot.slane %v1047, %v1059
        %v1061 = vlaneseq
        %v1062 = vshrl.u32 %v1061, 7
        %v1063 = vsub.s32 0, %v1062
        %v1064 = vrot.slane %v1048, %v1063
        %v1069 = vadd.f32 %v685, %v1052
        %v1070 = vadd.f32 %v689, %v1052
        %v1071 = vadd.f32 %v695, %v1056
        %v1072 = vadd.f32 %v699, %v1056
        %v1073 = vadd.f32 %v705, %v1060
        %v1074 = vadd.f32 %v709, %v1060
        %v1075 = vadd.f32 %v715, %v1064
        %v1076 = vadd.f32 %v719, %v1064
        %v1077 = vlaneseq
        %v1078 = vand.u32 %v1077, 127
        %vm1079 = vcmp.lt.s32.totalorder %v1078, 8
        %v1080 = vsel %vm1079, %v1016, 0.0
        %v1081 = vsel %vm1079, %v1017, 0.0
        %v1082 = vsel %vm1079, %v1018, 0.0
        %v1083 = vsel %vm1079, %v1019, 0.0
        %v1084 = vsel %vm1079, %v1020, 0.0
        %v1085 = vsel %vm1079, %v1021, 0.0
        %v1086 = vsel %vm1079, %v1022, 0.0
        %v1087 = vsel %vm1079, %v1023, 0.0
        %1088 = vadd.xlane.f32.xlu0 %v1080
        %v1089 = vpop.xlane.xlu0 %1088
        %1090 = vadd.xlane.f32.xlu0 %v1081
        %v1091 = vpop.xlane.xlu0 %1090
        %1092 = vadd.xlane.f32.xlu0 %v1082
        %v1093 = vpop.xlane.xlu0 %1092
        %1094 = vadd.xlane.f32.xlu0 %v1083
        %v1095 = vpop.xlane.xlu0 %1094
        %1096 = vadd.xlane.f32.xlu0 %v1084
        %v1097 = vpop.xlane.xlu0 %1096
        %1098 = vadd.xlane.f32.xlu0 %v1085
        %v1099 = vpop.xlane.xlu0 %1098
        %1100 = vadd.xlane.f32.xlu0 %v1086
        %v1101 = vpop.xlane.xlu0 %1100
        %1102 = vadd.xlane.f32.xlu0 %v1087
        %v1103 = vpop.xlane.xlu0 %1102
        %v1104 = vrcp.pop 8.0
        %v1105 = vmul.f32 %v1089, %v1104
        %v1106 = vmul.f32 %v1091, %v1104
        %v1107 = vmul.f32 %v1093, %v1104
        %v1108 = vmul.f32 %v1095, %v1104
        %v1109 = vmul.f32 %v1097, %v1104
        %v1110 = vmul.f32 %v1099, %v1104
        %v1111 = vmul.f32 %v1101, %v1104
        %v1112 = vmul.f32 %v1103, %v1104
        %v1113 = vsub.f32 %v1016, %v1105
        %v1114 = vsub.f32 %v1017, %v1106
        %v1115 = vsub.f32 %v1018, %v1107
        %v1116 = vsub.f32 %v1019, %v1108
        %v1117 = vsub.f32 %v1020, %v1109
        %v1118 = vsub.f32 %v1021, %v1110
        %v1119 = vsub.f32 %v1022, %v1111
        %v1120 = vsub.f32 %v1023, %v1112
        %v1121 = vsel %vm1079, %v1113, 0.0
        %v1122 = vsel %vm1079, %v1114, 0.0
        %v1123 = vsel %vm1079, %v1115, 0.0
        %v1124 = vsel %vm1079, %v1116, 0.0
        %v1125 = vsel %vm1079, %v1117, 0.0
        %v1126 = vsel %vm1079, %v1118, 0.0
        %v1127 = vsel %vm1079, %v1119, 0.0
        %v1128 = vsel %vm1079, %v1120, 0.0
        %v1129 = vmul.f32 %v1121, %v1121
        %v1130 = vmul.f32 %v1122, %v1122
        %v1131 = vmul.f32 %v1123, %v1123
        %v1132 = vmul.f32 %v1124, %v1124
        %v1133 = vmul.f32 %v1125, %v1125
        %v1134 = vmul.f32 %v1126, %v1126
        %v1135 = vmul.f32 %v1127, %v1127
        %v1136 = vmul.f32 %v1128, %v1128
        %1137 = vadd.xlane.f32.xlu0 %v1129
        %v1138 = vpop.xlane.xlu0 %1137
        %1139 = vadd.xlane.f32.xlu0 %v1130
        %v1140 = vpop.xlane.xlu0 %1139
        %1141 = vadd.xlane.f32.xlu0 %v1131
        %v1142 = vpop.xlane.xlu0 %1141
        %1143 = vadd.xlane.f32.xlu0 %v1132
        %v1144 = vpop.xlane.xlu0 %1143
        %1145 = vadd.xlane.f32.xlu0 %v1133
        %v1146 = vpop.xlane.xlu0 %1145
        %1147 = vadd.xlane.f32.xlu0 %v1134
        %v1148 = vpop.xlane.xlu0 %1147
        %1149 = vadd.xlane.f32.xlu0 %v1135
        %v1150 = vpop.xlane.xlu0 %1149
        %1151 = vadd.xlane.f32.xlu0 %v1136
        %v1152 = vpop.xlane.xlu0 %1151
        %v1153 = vmul.f32 %v1138, %v1104
        %v1154 = vmul.f32 %v1140, %v1104
        %v1155 = vmul.f32 %v1142, %v1104
        %v1156 = vmul.f32 %v1144, %v1104
        %v1157 = vmul.f32 %v1146, %v1104
        %v1158 = vmul.f32 %v1148, %v1104
        %v1159 = vmul.f32 %v1150, %v1104
        %v1160 = vmul.f32 %v1152, %v1104
        %v1161 = vadd.f32 %v1153, 1e-05
        %v1162 = vadd.f32 %v1154, 1e-05
        %v1163 = vadd.f32 %v1155, 1e-05
        %v1164 = vadd.f32 %v1156, 1e-05
        %v1165 = vadd.f32 %v1157, 1e-05
        %v1166 = vadd.f32 %v1158, 1e-05
        %v1167 = vadd.f32 %v1159, 1e-05
        %v1168 = vadd.f32 %v1160, 1e-05
        %v1169 = vrsqrt.pop %v1161
        %v1170 = vrsqrt.pop %v1162
        %v1171 = vrsqrt.pop %v1163
        %v1172 = vrsqrt.pop %v1164
        %v1173 = vrsqrt.pop %v1165
        %v1174 = vrsqrt.pop %v1166
        %v1175 = vrsqrt.pop %v1167
        %v1176 = vrsqrt.pop %v1168
        %v1177 = vmul.f32 %v1113, %v1169
        %v1178 = vmul.f32 %v1114, %v1170
        %v1179 = vmul.f32 %v1115, %v1171
        %v1180 = vmul.f32 %v1116, %v1172
        %v1181 = vmul.f32 %v1117, %v1173
        %v1182 = vmul.f32 %v1118, %v1174
        %v1183 = vmul.f32 %v1119, %v1175
        %v1184 = vmul.f32 %v1120, %v1176
        %v1185 = vadd.f32 %v1177, %v1069
        %v1186 = vadd.f32 %v1178, %v1070
        %v1187 = vadd.f32 %v1179, %v1071
        %v1188 = vadd.f32 %v1180, %v1072
        %v1189 = vadd.f32 %v1181, %v1073
        %v1190 = vadd.f32 %v1182, %v1074
        %v1191 = vadd.f32 %v1183, %v1075
        %v1192 = vadd.f32 %v1184, %v1076
        %1193 = vst [vmem:[%s344] sm:$0xff] %v1185
        %1194 = vst [vmem:[%s344 + $0x8] sm:$0xff] %v1186
        %1195 = vst [vmem:[%s344 + $0x10] sm:$0xff] %v1187
        %1196 = vst [vmem:[%s344 + $0x18] sm:$0xff] %v1188
        %1197 = vst [vmem:[%s344 + $0x20] sm:$0xff] %v1189
        %1198 = vst [vmem:[%s344 + $0x28] sm:$0xff] %v1190
        %1199 = vst [vmem:[%s344 + $0x30] sm:$0xff] %v1191
        %1200 = vst [vmem:[%s344 + $0x38] sm:$0xff] %v1192
        %s1201 = sand.u32 %s224, 1
        %s1202 = scalar_lea.sflag [#allocation3], %s1201
        %s1203 = sand.u32 %s224, 1
        %s1204 = smul.addr %s1203, 64
        %s1205 = scalar_lea.vmem [#allocation2], %s1204
        // Predicated region
        $region53: #{tpu_custom_call.1} parent=51 // pred_check
          %p1206 = pneg %p234
        $region54: #{tpu_custom_call.1} parent=51 // pred_check_branch
          %1208 = sbr.rel (%p1206) target = $region56
        $region55: #{tpu_custom_call.1} parent=51 // pred_region
          %s1209 = smul.u32 4, %s26
          %s1210 = smul.u32 2, %s27
          %s1212 = ssub.s32 1024, 1024
          %1213 = vsyncadd %s1202, %s1212
          %s1214 = smul.addr %s1209, 2
          %s1215 = sadd.s32 %s1210, %s1214
          %s1216 = smul.addr %s1215, 128
          %s1217 = scalar_lea.hbm %s8, %s1216
          %s1218 = sshll.u32 %s1205, 4
          %s1219 = int_to_ptr.vmem [resolvable:$true] %s1218
          %1224 = dma.vmem_to_hbm [thread:$0]  %s1219, 1024, %s1217, %s1202, 128, 128, 8
        $region56: #{tpu_custom_call.1} parent=51 // pred_fallthru
          _
      $region52: #{tpu_custom_call.1} parent=5 // pred_fallthru
        _
      %p1225 = scmp.le.s32.totalorder 2, %s17
      // Predicated region
      $region57: #{tpu_custom_call.1} parent=5 // pred_check
        %p1226 = pneg %p1225
      $region58: #{tpu_custom_call.1} parent=5 // pred_check_branch
        %1228 = sbr.rel (%p1226) target = $region60
      $region59: #{tpu_custom_call.1} parent=5 // pred_region
        %s1229 = ssub.s32 %s17, 2
        // Predicated region
        $region61: #{tpu_custom_call.1} parent=59 // pred_check
          %p1230 = pneg %p240
        $region62: #{tpu_custom_call.1} parent=59 // pred_check_branch
          %1232 = sbr.rel (%p1230) target = $region64
        $region63: #{tpu_custom_call.1} parent=59 // pred_region
          %s1233 = sand.u32 %s225, 1
          %s1234 = scalar_lea.sflag [#allocation3], %s1233
          %s1235 = sand.u32 %s225, 1
          %s1236 = smul.addr %s1235, 64
          %s1237 = scalar_lea.vmem [#allocation2], %s1236
          %1238 = dma.done %s1234, 1024
        $region64: #{tpu_custom_call.1} parent=59 // pred_fallthru
          _
      $region60: #{tpu_custom_call.1} parent=5 // pred_fallthru
        _
    $region6: #{tpu_custom_call.1} parent=1 // loop_footer
      %s21 = sadd.s32 1, %s17
    $region7: #{tpu_custom_call.1} parent=1 // loop_footer_branch
      %16 = sbr.rel target = $region3
    $region8: #{tpu_custom_call.1} parent=1 // loop_exit
      _
    %1239 = vsyncpa [#allocation3], 1
    %s1240 = scalar_lea.sflag [#allocation3], 1
    %1241 = vsyncpa %s1240, 1

</llo_original>
